<compile_context>
chip_gen: v5e
topology: v5e:2x2
jax: 0.10.0
libtpu: 0.0.40
codegen_flags: <defaults>
</compile_context>

<pallas_src>
import jax
import jax.numpy as jnp
from jax.experimental import pallas as pl
from jax.experimental.pallas import tpu as pltpu


_NEG_SLOPE = 0.01


def _leaky_relu(x):
    return jnp.where(x >= 0, x, _NEG_SLOPE * x)


def ai_network_kernel(x_ref, w1_ref, b1_ref, w2_ref, b2_ref, w3_ref, b3_ref,
                      out_ref):
    # x_ref: (3, TB) feature-major input tile; batch on the lane axis.
    x = x_ref[...]

    # fc1 + leaky_relu : (10,3) @ (3,TB) -> (10,TB)
    h1 = jnp.dot(w1_ref[...], x, preferred_element_type=jnp.float32)
    h1 = _leaky_relu(h1 + b1_ref[...])

    # fc2 + leaky_relu : (20,10) @ (10,TB) -> (20,TB)
    h2 = jnp.dot(w2_ref[...], h1, preferred_element_type=jnp.float32)
    h2 = _leaky_relu(h2 + b2_ref[...])

    # fc3 : (5,20) @ (20,TB) -> (5,TB)
    h3 = jnp.dot(w3_ref[...], h2, preferred_element_type=jnp.float32)
    h3 = h3 + b3_ref[...]

    # Numerically stable softmax over the feature axis (axis 0: exactly the
    # 5 valid rows, so padded-batch columns cannot leak into the reduction).
    m = jnp.max(h3, axis=0, keepdims=True)
    e = jnp.exp(h3 - m)
    denom = jnp.sum(e, axis=0, keepdims=True)
    out_ref[...] = e / denom   # exact divide: approx reciprocal was too lossy
    # TODO(synk): the torch forward's `print(...)` side effect is debug-only
    # and is not reproduced in the kernel.


def _round_up(x, m):
    return (x + m - 1) // m * m


def prepare_params(params):
    """One-time layout prep: weights stay (out, in); biases become (out, 1)."""
    return {
        "w1": jnp.asarray(params["w1"], jnp.float32),           # (10, 3)
        "b1": jnp.asarray(params["b1"], jnp.float32)[:, None],  # (10, 1)
        "w2": jnp.asarray(params["w2"], jnp.float32),           # (20, 10)
        "b2": jnp.asarray(params["b2"], jnp.float32)[:, None],  # (20, 1)
        "w3": jnp.asarray(params["w3"], jnp.float32),           # (5, 20)
        "b3": jnp.asarray(params["b3"], jnp.float32)[:, None],  # (5, 1)
    }


def ai_network_forward(s, prepared, block_b=1024):
    """s: (B, 3) float32 (PyTorch layout). Returns (B, 5) softmax output."""
    B = s.shape[0]
    # Lane-dense batch tile: multiple of 128, capped at block_b.
    tb = min(block_b, _round_up(B, 128))
    b_pad = _round_up(B, tb)

    # Feature-major, zero-padded batch: (3, b_pad).  Each DMA row is one long
    # contiguous run of b_pad*4 bytes instead of 12-byte strided rows.
    x = jnp.pad(jnp.asarray(s, jnp.float32).T, ((0, 0), (0, b_pad - B)))

    out_fm = pl.pallas_call(
        ai_network_kernel,
        out_shape=jax.ShapeDtypeStruct((5, b_pad), jnp.float32),
        grid=(b_pad // tb,),
        in_specs=[
            pl.BlockSpec((3, tb), lambda i: (0, i)),     # input tile
            pl.BlockSpec((10, 3), lambda i: (0, 0)),     # weights/biases stay
            pl.BlockSpec((10, 1), lambda i: (0, 0)),     # resident in VMEM
            pl.BlockSpec((20, 10), lambda i: (0, 0)),
            pl.BlockSpec((20, 1), lambda i: (0, 0)),
            pl.BlockSpec((5, 20), lambda i: (0, 0)),
            pl.BlockSpec((5, 1), lambda i: (0, 0)),
        ],
        out_specs=pl.BlockSpec((5, tb), lambda i: (0, i)),
        compiler_params=pltpu.CompilerParams(
            dimension_semantics=("parallel",),  # shard batch across TCs (v7x)
        ),
    )(x, prepared["w1"], prepared["b1"], prepared["w2"], prepared["b2"],
      prepared["w3"], prepared["b3"])

    # Back to PyTorch layout, drop batch padding.
    return out_fm[:, :B].T


def make_params():
    """Deterministic synthetic parameters matching nn.Linear shapes."""
    key = jax.random.PRNGKey(42)
    k1, k2, k3, k4, k5, k6 = jax.random.split(key, 6)
    # PyTorch layout: weight (out_features, in_features), bias (out_features,)
    return {
        "w1": jax.random.normal(k1, (10, 3), jnp.float32) * 0.5,
        "b1": jax.random.normal(k2, (10,), jnp.float32) * 0.1,
        "w2": jax.random.normal(k3, (20, 10), jnp.float32) * 0.3,
        "b2": jax.random.normal(k4, (20,), jnp.float32) * 0.1,
        "w3": jax.random.normal(k5, (5, 20), jnp.float32) * 0.3,
        "b3": jax.random.normal(k6, (5,), jnp.float32) * 0.1,
    }


def reference_forward(s, params):
    """Pure-JAX reference (PyTorch semantics) for correctness checking."""
    lr = lambda x: jnp.where(x >= 0, x, _NEG_SLOPE * x)
    s1 = lr(s @ params["w1"].T + params["b1"])
    s2 = lr(s1 @ params["w2"].T + params["b2"])
    s3 = s2 @ params["w3"].T + params["b3"]
    return jax.nn.softmax(s3, axis=1)


if __name__ == "__main__":
    params = make_params()
    prepared = prepare_params(params)

    # Small batch (matches the module's intended usage).
    B = 8
    key = jax.random.PRNGKey(0)
    s = jax.random.normal(key, (B, 3), jnp.float32)

    out = jax.block_until_ready(ai_network_forward(s, prepared))
    ref = reference_forward(s, params)
    assert out.shape == (B, 5)
    assert jnp.allclose(out, ref, atol=1e-4, rtol=1e-4), "mismatch vs reference"
    assert jnp.allclose(jnp.sum(out, axis=1), jnp.ones(B), atol=1e-4)

    # Larger, non-multiple-of-tile batch to exercise the grid + padding path.
    B2 = 300
    s2 = jax.random.normal(jax.random.PRNGKey(1), (B2, 3), jnp.float32)
    out2 = jax.block_until_ready(ai_network_forward(s2, prepared, block_b=128))
    ref2 = reference_forward(s2, params)
    assert out2.shape == (B2, 5)
    assert jnp.allclose(out2, ref2, atol=1e-4, rtol=1e-4), "mismatch (B=300)"
    assert jnp.allclose(jnp.sum(out2, axis=1), jnp.ones(B2), atol=1e-4)

    print("KERNEL_OK")
</pallas_src>

<mosaic_0001>
module attributes {stable_mosaic.version = 11 : i64} {
  func.func @ai_network_kernel(%arg0: i32, %arg1: memref<3x128xf32, #tpu.memory_space<vmem>>, %arg2: memref<10x3xf32, #tpu.memory_space<vmem>>, %arg3: memref<10x1xf32, #tpu.memory_space<vmem>>, %arg4: memref<20x10xf32, #tpu.memory_space<vmem>>, %arg5: memref<20x1xf32, #tpu.memory_space<vmem>>, %arg6: memref<5x20xf32, #tpu.memory_space<vmem>>, %arg7: memref<5x1xf32, #tpu.memory_space<vmem>>, %arg8: memref<5x128xf32, #tpu.memory_space<vmem>>) attributes {dimension_semantics = [#tpu.dimension_semantics<parallel>], iteration_bounds = array<i64: 1>, scalar_prefetch = 0 : i64, scratch_operands = 0 : i64, tpu.core_type = #tpu.core_type<tc>, window_params = [{transform_indices = @transform_0, window_bounds = array<i64: 3, 128>}, {pipeline_mode = #tpu.pipeline_mode<synchronous>, transform_indices = @transform_1, window_bounds = array<i64: 10, 3>}, {pipeline_mode = #tpu.pipeline_mode<synchronous>, transform_indices = @transform_2, window_bounds = array<i64: 10, 1>}, {pipeline_mode = #tpu.pipeline_mode<synchronous>, transform_indices = @transform_3, window_bounds = array<i64: 20, 10>}, {pipeline_mode = #tpu.pipeline_mode<synchronous>, transform_indices = @transform_4, window_bounds = array<i64: 20, 1>}, {pipeline_mode = #tpu.pipeline_mode<synchronous>, transform_indices = @transform_5, window_bounds = array<i64: 5, 20>}, {pipeline_mode = #tpu.pipeline_mode<synchronous>, transform_indices = @transform_6, window_bounds = array<i64: 5, 1>}, {transform_indices = @transform_7, window_bounds = array<i64: 5, 128>}]} {
    %c0 = arith.constant 0 : index
    %c0_0 = arith.constant 0 : index
    %0 = vector.load %arg1[%c0, %c0_0] : memref<3x128xf32, #tpu.memory_space<vmem>>, vector<3x128xf32>
    %c0_1 = arith.constant 0 : index
    %c0_2 = arith.constant 0 : index
    %1 = vector.load %arg2[%c0_1, %c0_2] : memref<10x3xf32, #tpu.memory_space<vmem>>, vector<10x3xf32>
    %cst = arith.constant dense<0.000000e+00> : vector<10x128xf32>
    %2 = tpu.matmul %1, %0, %cst {dimension_numbers = #tpu.dot_dimension_numbers<[1], [0], [0], [1], [0, 0, 1, 1], [], []>} : vector<10x3xf32>, vector<3x128xf32>, vector<10x128xf32> -> vector<10x128xf32>
    %c0_3 = arith.constant 0 : index
    %c0_4 = arith.constant 0 : index
    %3 = vector.load %arg3[%c0_3, %c0_4] : memref<10x1xf32, #tpu.memory_space<vmem>>, vector<10x1xf32>
    %4 = vector.broadcast %3 : vector<10x1xf32> to vector<10x128xf32>
    %5 = arith.addf %2, %4 : vector<10x128xf32>
    %cst_5 = arith.constant 0.000000e+00 : f32
    %6 = vector.broadcast %cst_5 : f32 to vector<10x128xf32>
    %7 = arith.cmpf oge, %5, %6 : vector<10x128xf32>
    %cst_6 = arith.constant 0.00999999977 : f32
    %8 = vector.broadcast %cst_6 : f32 to vector<10x128xf32>
    %9 = arith.mulf %8, %5 : vector<10x128xf32>
    %10 = arith.select %7, %5, %9 : vector<10x128xi1>, vector<10x128xf32>
    %c0_7 = arith.constant 0 : index
    %c0_8 = arith.constant 0 : index
    %11 = vector.load %arg4[%c0_7, %c0_8] : memref<20x10xf32, #tpu.memory_space<vmem>>, vector<20x10xf32>
    %cst_9 = arith.constant dense<0.000000e+00> : vector<20x128xf32>
    %12 = tpu.matmul %11, %10, %cst_9 {dimension_numbers = #tpu.dot_dimension_numbers<[1], [0], [0], [1], [0, 0, 1, 1], [], []>} : vector<20x10xf32>, vector<10x128xf32>, vector<20x128xf32> -> vector<20x128xf32>
    %c0_10 = arith.constant 0 : index
    %c0_11 = arith.constant 0 : index
    %13 = vector.load %arg5[%c0_10, %c0_11] : memref<20x1xf32, #tpu.memory_space<vmem>>, vector<20x1xf32>
    %14 = vector.broadcast %13 : vector<20x1xf32> to vector<20x128xf32>
    %15 = arith.addf %12, %14 : vector<20x128xf32>
    %cst_12 = arith.constant 0.000000e+00 : f32
    %16 = vector.broadcast %cst_12 : f32 to vector<20x128xf32>
    %17 = arith.cmpf oge, %15, %16 : vector<20x128xf32>
    %cst_13 = arith.constant 0.00999999977 : f32
    %18 = vector.broadcast %cst_13 : f32 to vector<20x128xf32>
    %19 = arith.mulf %18, %15 : vector<20x128xf32>
    %20 = arith.select %17, %15, %19 : vector<20x128xi1>, vector<20x128xf32>
    %c0_14 = arith.constant 0 : index
    %c0_15 = arith.constant 0 : index
    %21 = vector.load %arg6[%c0_14, %c0_15] : memref<5x20xf32, #tpu.memory_space<vmem>>, vector<5x20xf32>
    %cst_16 = arith.constant dense<0.000000e+00> : vector<5x128xf32>
    %22 = tpu.matmul %21, %20, %cst_16 {dimension_numbers = #tpu.dot_dimension_numbers<[1], [0], [0], [1], [0, 0, 1, 1], [], []>} : vector<5x20xf32>, vector<20x128xf32>, vector<5x128xf32> -> vector<5x128xf32>
    %c0_17 = arith.constant 0 : index
    %c0_18 = arith.constant 0 : index
    %23 = vector.load %arg7[%c0_17, %c0_18] : memref<5x1xf32, #tpu.memory_space<vmem>>, vector<5x1xf32>
    %24 = vector.broadcast %23 : vector<5x1xf32> to vector<5x128xf32>
    %25 = arith.addf %22, %24 : vector<5x128xf32>
    %cst_19 = arith.constant dense<0xFF800000> : vector<128xf32>
    %26 = vector.multi_reduction <maximumf>, %25, %cst_19 [0] : vector<5x128xf32> to vector<128xf32>
    %27 = vector.shape_cast %26 : vector<128xf32> to vector<1x128xf32>
    %28 = vector.broadcast %27 : vector<1x128xf32> to vector<5x128xf32>
    %29 = arith.subf %25, %28 : vector<5x128xf32>
    %30 = math.exp %29 : vector<5x128xf32>
    %cst_20 = arith.constant dense<0.000000e+00> : vector<128xf32>
    %31 = vector.multi_reduction <add>, %30, %cst_20 [0] : vector<5x128xf32> to vector<128xf32>
    %32 = vector.shape_cast %31 : vector<128xf32> to vector<1x128xf32>
    %33 = vector.broadcast %32 : vector<1x128xf32> to vector<5x128xf32>
    %34 = arith.divf %30, %33 : vector<5x128xf32>
    %c0_21 = arith.constant 0 : index
    %c0_22 = arith.constant 0 : index
    %35 = vector.load %arg8[%c0_21, %c0_22] : memref<5x128xf32, #tpu.memory_space<vmem>>, vector<5x128xf32>
    tpu.vector_store %arg8[%c0_21, %c0_22], %34 {strides = array<i32>} : memref<5x128xf32, #tpu.memory_space<vmem>>, vector<5x128xf32>,
    return
  }
  func.func @transform_0(%arg0: i32) -> (i32, i32) {
    %c0_i32 = arith.constant 0 : i32
    %c0_i32_0 = arith.constant 0 : i32
    return %c0_i32, %arg0 : i32, i32
  }
  func.func @transform_1(%arg0: i32) -> (i32, i32) {
    %c0_i32 = arith.constant 0 : i32
    %c0_i32_0 = arith.constant 0 : i32
    %c0_i32_1 = arith.constant 0 : i32
    return %c0_i32, %c0_i32_0 : i32, i32
  }
  func.func @transform_2(%arg0: i32) -> (i32, i32) {
    %c0_i32 = arith.constant 0 : i32
    %c0_i32_0 = arith.constant 0 : i32
    %c0_i32_1 = arith.constant 0 : i32
    return %c0_i32, %c0_i32_0 : i32, i32
  }
  func.func @transform_3(%arg0: i32) -> (i32, i32) {
    %c0_i32 = arith.constant 0 : i32
    %c0_i32_0 = arith.constant 0 : i32
    %c0_i32_1 = arith.constant 0 : i32
    return %c0_i32, %c0_i32_0 : i32, i32
  }
  func.func @transform_4(%arg0: i32) -> (i32, i32) {
    %c0_i32 = arith.constant 0 : i32
    %c0_i32_0 = arith.constant 0 : i32
    %c0_i32_1 = arith.constant 0 : i32
    return %c0_i32, %c0_i32_0 : i32, i32
  }
  func.func @transform_5(%arg0: i32) -> (i32, i32) {
    %c0_i32 = arith.constant 0 : i32
    %c0_i32_0 = arith.constant 0 : i32
    %c0_i32_1 = arith.constant 0 : i32
    return %c0_i32, %c0_i32_0 : i32, i32
  }
  func.func @transform_6(%arg0: i32) -> (i32, i32) {
    %c0_i32 = arith.constant 0 : i32
    %c0_i32_0 = arith.constant 0 : i32
    %c0_i32_1 = arith.constant 0 : i32
    return %c0_i32, %c0_i32_0 : i32, i32
  }
  func.func @transform_7(%arg0: i32) -> (i32, i32) {
    %c0_i32 = arith.constant 0 : i32
    %c0_i32_0 = arith.constant 0 : i32
    return %c0_i32, %arg0 : i32, i32
  }
}

</mosaic_0001>

<llo_original>
// kernel: tpu_custom_call.1
$region0: #{tpu_custom_call.1}
  #allocation0 [shape = 'u32[]', space=smem, size = 0x4, offset = 0x4, fixed_abs, tag = 'smem constant byte address 0x4 - core index']
  #allocation1 [shape = 'u32[72,128]{1,0:T(1,128)}', space=vmem, size = 0x9000, scoped, tag = 'internal scratch']
  %s0 = inlined_call_operand.vmem [shape: f32[3,128], index: 0, kind: input, shape index: {}]
  %s1 = inlined_call_operand.vmem [shape: f32[10,3], index: 1, kind: input, shape index: {}]
  %s2 = inlined_call_operand.vmem [shape: f32[10,1], index: 2, kind: input, shape index: {}]
  %s3 = inlined_call_operand.vmem [shape: f32[20,10], index: 3, kind: input, shape index: {}]
  %s4 = inlined_call_operand.vmem [shape: f32[20,1], index: 4, kind: input, shape index: {}]
  %s5 = inlined_call_operand.vmem [shape: f32[5,20], index: 5, kind: input, shape index: {}]
  %s6 = inlined_call_operand.vmem [shape: f32[5,1], index: 6, kind: input, shape index: {}]
  %s7 = inlined_call_operand.hbm [shape: f32[5,128], index: 7, kind: output, shape index: {}]
  %s8 = sld [smem:[#allocation0]]
  $region38: #{tpu_custom_call.1} parent=0
    _
  %s10 = ssub.s32 1, %s8
  %s11 = scalar_select 0, %s10, %s8
  $region1: #{tpu_custom_call.1} parent=0
    #allocation2 [shape = 'u8[4096]{0}', space=vmem, size = 0x1000, scoped, tag = 'output window, operand 0, single buffered']
    #allocation3 [shape = 's32[1]{0}', space=sflag, size = 0x4, scoped, tag = 'scoped memory for tpu_custom_call.1']
    %12 = vsyncpa [#allocation3], 0
    // Predicated region
    $region2: #{tpu_custom_call.1} parent=1 // pred_check
      _
    $region3: #{tpu_custom_call.1} parent=1 // pred_check_branch
      %14 = sbr.rel (0) target = $region5
    $region4: #{tpu_custom_call.1} parent=1 // pred_region
      _
    $region5: #{tpu_custom_call.1} parent=1 // pred_fallthru
      _
    // Predicated region
    $region6: #{tpu_custom_call.1} parent=1 // pred_check
      _
    $region7: #{tpu_custom_call.1} parent=1 // pred_check_branch
      %16 = sbr.rel (0) target = $region9
    $region8: #{tpu_custom_call.1} parent=1 // pred_region
      _
    $region9: #{tpu_custom_call.1} parent=1 // pred_fallthru
      _
    // Predicated region
    $region10: #{tpu_custom_call.1} parent=1 // pred_check
      _
    $region11: #{tpu_custom_call.1} parent=1 // pred_check_branch
      %18 = sbr.rel (0) target = $region13
    $region12: #{tpu_custom_call.1} parent=1 // pred_region
      _
    $region13: #{tpu_custom_call.1} parent=1 // pred_fallthru
      _
    // Predicated region
    $region14: #{tpu_custom_call.1} parent=1 // pred_check
      _
    $region15: #{tpu_custom_call.1} parent=1 // pred_check_branch
      %20 = sbr.rel (0) target = $region17
    $region16: #{tpu_custom_call.1} parent=1 // pred_region
      _
    $region17: #{tpu_custom_call.1} parent=1 // pred_fallthru
      _
    // Predicated region
    $region18: #{tpu_custom_call.1} parent=1 // pred_check
      _
    $region19: #{tpu_custom_call.1} parent=1 // pred_check_branch
      %22 = sbr.rel (0) target = $region21
    $region20: #{tpu_custom_call.1} parent=1 // pred_region
      _
    $region21: #{tpu_custom_call.1} parent=1 // pred_fallthru
      _
    // Predicated region
    $region22: #{tpu_custom_call.1} parent=1 // pred_check
      _
    $region23: #{tpu_custom_call.1} parent=1 // pred_check_branch
      %24 = sbr.rel (0) target = $region25
    $region24: #{tpu_custom_call.1} parent=1 // pred_region
      _
    $region25: #{tpu_custom_call.1} parent=1 // pred_fallthru
      _
    // Predicated region
    $region26: #{tpu_custom_call.1} parent=1 // pred_check
      _
    $region27: #{tpu_custom_call.1} parent=1 // pred_check_branch
      %26 = sbr.rel (0) target = $region29
    $region28: #{tpu_custom_call.1} parent=1 // pred_region
      _
    $region29: #{tpu_custom_call.1} parent=1 // pred_fallthru
      _
    %v27 = vld [vmem:[%s0] sm:$0x7]
    %v28 = vld [vmem:[%s1] sm:$0xff]
    %v29 = vld [vmem:[%s1 + $0x8] sm:$0x3]
    %v30 = vld [vmem:[%s2] sm:$0xff]
    %v31 = vld [vmem:[%s2 + $0x8] sm:$0x3]
    %33 = vset.pattern.permute.xlu0 0
    %34 = vperm.xlu0 %33, %v30
    %v35 = vpop.permute.xlu0 %34
    %38 = vset.pattern.permute.xlu0 0
    %39 = vperm.xlu0 %38, %v31
    %v40 = vpop.permute.xlu0 %39
    %vm42 = vcmask 23552
    %v44 = vsel %vm42, %v28, 0
    %v47 = vsel %vm42, %v29, 0
    %vm49 = vcmask 1042432
    %v51 = vsel %vm49, %v27, 0
    %53 = vmatpush.msra.mxu0 0.0
    %54 = vmatpush.msra.mxu0 0.0
    %55 = vmatpush.msra.mxu0 0.0
    %56 = vmatpush.msra.mxu0 0.0
    %57 = vmatpush.msra.mxu0 0.0
    %58 = vmatpush.msra.mxu0 0.0
    %59 = vmatpush.msra.mxu0 0.0
    %60 = vmatpush.msra.mxu0 0.0
    %61 = vmatpush.msra.mxu0 0.0
    %62 = vmatpush.msra.mxu0 0.0
    %63 = vmatpush.msra.mxu0 0.0
    %64 = vmatpush.msra.mxu0 0.0
    %65 = vmatpush.msra.mxu0 0.0
    %66 = vmatpush.msra.mxu0 0.0
    %67 = vmatpush.msra.mxu0 0.0
    %68 = vmatpush.msra.mxu0 %v51
    %69 = vmatmul.f32.gmra.mxu0 %v44
    %v70 = vpop.f32.mrf.mxu0
    %v71 = vadd.f32 %v35, %v70
    %72 = vmatmul.f32.gmra.mxu0 %v47
    %v73 = vpop.f32.mrf.mxu0
    %v74 = vadd.f32 %v40, %v73
    %75 = vdwg.mxu0
    %vm76 = vcmp.ge.f32.partialorder %v71, 0.0
    %vm77 = vcmp.ge.f32.partialorder %v74, 0.0
    %v78 = vmul.f32 %v71, 0.01
    %v79 = vmul.f32 %v74, 0.01
    %v80 = vsel %vm76, %v71, %v78
    %v81 = vsel %vm77, %v74, %v79
    %v82 = vld [vmem:[%s3] sm:$0xff]
    %v83 = vld [vmem:[%s3 + $0x8] sm:$0xff]
    %v84 = vld [vmem:[%s3 + $0x10] sm:$0xf]
    %v85 = vld [vmem:[%s4] sm:$0xff]
    %v86 = vld [vmem:[%s4 + $0x8] sm:$0xff]
    %v87 = vld [vmem:[%s4 + $0x10] sm:$0xf]
    %89 = vset.pattern.permute.xlu0 0
    %90 = vperm.xlu0 %89, %v85
    %v91 = vpop.permute.xlu0 %90
    %94 = vset.pattern.permute.xlu0 0
    %95 = vperm.xlu0 %94, %v86
    %v96 = vpop.permute.xlu0 %95
    %99 = vset.pattern.permute.xlu0 0
    %100 = vperm.xlu0 %99, %v87
    %v101 = vpop.permute.xlu0 %100
    %vm103 = vcmask 80896
    %v105 = vsel %vm103, %v82, 0
    %v108 = vsel %vm103, %v83, 0
    %v111 = vsel %vm103, %v84, 0
    %vm113 = vcmask 1041408
    %v115 = vsel %vm113, %v81, 0
    %117 = vmatpush.msra.mxu0 0.0
    %118 = vmatpush.msra.mxu0 0.0
    %119 = vmatpush.msra.mxu0 0.0
    %120 = vmatpush.msra.mxu0 0.0
    %121 = vmatpush.msra.mxu0 0.0
    %122 = vmatpush.msra.mxu0 0.0
    %123 = vmatpush.msra.mxu0 0.0
    %124 = vmatpush.msra.mxu0 0.0
    %125 = vmatpush.msra.mxu0 0.0
    %126 = vmatpush.msra.mxu0 0.0
    %127 = vmatpush.msra.mxu0 0.0
    %128 = vmatpush.msra.mxu0 0.0
    %129 = vmatpush.msra.mxu0 0.0
    %130 = vmatpush.msra.mxu0 0.0
    %131 = vmatpush.msra.mxu0 %v115
    %132 = vmatpush.msra.mxu0 %v80
    %133 = vmatmul.f32.gmra.mxu0 %v105
    %v134 = vpop.f32.mrf.mxu0
    %v135 = vadd.f32 %v91, %v134
    %136 = vmatmul.f32.gmra.mxu0 %v108
    %v137 = vpop.f32.mrf.mxu0
    %v138 = vadd.f32 %v96, %v137
    %139 = vmatmul.f32.gmra.mxu0 %v111
    %v140 = vpop.f32.mrf.mxu0
    %v141 = vadd.f32 %v101, %v140
    %142 = vdwg.mxu0
    %vm143 = vcmp.ge.f32.partialorder %v135, 0.0
    %vm144 = vcmp.ge.f32.partialorder %v138, 0.0
    %vm145 = vcmp.ge.f32.partialorder %v141, 0.0
    %v146 = vmul.f32 %v135, 0.01
    %v147 = vmul.f32 %v138, 0.01
    %v148 = vmul.f32 %v141, 0.01
    %v149 = vsel %vm143, %v135, %v146
    %v150 = vsel %vm144, %v138, %v147
    %v151 = vsel %vm145, %v141, %v148
    %v152 = vld [vmem:[%s5] sm:$0x1f]
    %v153 = vld [vmem:[%s6] sm:$0x1f]
    %155 = vset.pattern.permute.xlu0 0
    %156 = vperm.xlu0 %155, %v153
    %v157 = vpop.permute.xlu0 %156
    %vm159 = vcmask 162816
    %v161 = vsel %vm159, %v152, 0
    %vm163 = vcmask 1043456
    %v165 = vsel %vm163, %v151, 0
    %167 = vmatpush.msra.mxu0 0.0
    %168 = vmatpush.msra.mxu0 0.0
    %169 = vmatpush.msra.mxu0 0.0
    %170 = vmatpush.msra.mxu0 0.0
    %171 = vmatpush.msra.mxu0 0.0
    %172 = vmatpush.msra.mxu0 0.0
    %173 = vmatpush.msra.mxu0 0.0
    %174 = vmatpush.msra.mxu0 0.0
    %175 = vmatpush.msra.mxu0 0.0
    %176 = vmatpush.msra.mxu0 0.0
    %177 = vmatpush.msra.mxu0 0.0
    %178 = vmatpush.msra.mxu0 0.0
    %179 = vmatpush.msra.mxu0 0.0
    %180 = vmatpush.msra.mxu0 %v165
    %181 = vmatpush.msra.mxu0 %v150
    %182 = vmatpush.msra.mxu0 %v149
    %183 = vmatmul.f32.gmra.mxu0 %v161
    %v184 = vpop.f32.mrf.mxu0
    %v185 = vadd.f32 %v157, %v184
    %186 = vdwg.mxu0
    %vm187 = vcmask 1044480
    %v188 = vsel %vm187, %v185, -inf
    %v189 = vrot.slane %v188, 4
    %v190 = vmax.f32 %v188, %v189
    %v191 = vrot.slane %v190, 2
    %v192 = vmax.f32 %v190, %v191
    %v193 = vrot.slane %v192, 1
    %v194 = vmax.f32 %v192, %v193
    %v195 = vsub.f32 %v185, %v194
    %v196 = vmul.f32 %v195, 1.442695
    %v197 = vpow.pop %v196
    %v198 = vsel %vm187, %v197, 0.0
    %v199 = vrot.slane %v198, 4
    %v200 = vadd.f32 %v198, %v199
    %v201 = vrot.slane %v200, 2
    %v202 = vadd.f32 %v200, %v201
    %v203 = vrot.slane %v202, 1
    %v204 = vadd.f32 %v202, %v203
    %v205 = vrcp.pop %v204
    %v206 = vmul.f32 %v204, %v205
    %v207 = vsub.f32 1.0, %v206
    %v208 = vmul.f32 %v205, %v207
    %v209 = vadd.f32 %v205, %v208
    %vm210 = vweird.f32 %v204
    %vm211 = vweird.f32 %v205
    %vm212 = vmor %vm210, %vm211
    %v213 = vsel %vm212, %v205, %v209
    %v214 = vand.u32 2147483647, %v204
    %vm215 = vcmp.eq.f32.partialorder %v214, 8.507059e+37
    %v216 = vand.u32 %v204, 2147483648
    %v217 = vor.u32 1.1754944e-38, %v216
    %v218 = vsel %vm215, %v217, %v213
    %v219 = vmul.f32 %v197, %v218
    %220 = vst [vmem:[#allocation2] sm:$0x1f] %v219
    // Predicated region
    $region30: #{tpu_custom_call.1} parent=1 // pred_check
      _
    $region31: #{tpu_custom_call.1} parent=1 // pred_check_branch
      %222 = sbr.rel (0) target = $region33
    $region32: #{tpu_custom_call.1} parent=1 // pred_region
      %224 = vsyncadd [#allocation3], 0
      %s226 = sshll.u32 [#allocation2], 4
      %s227 = int_to_ptr.vmem [resolvable:$true] %s226
      %s228 = sshll.u32 %s7, 4
      %s229 = int_to_ptr.hbm [resolvable:$true] %s228
      %231 = dma.vmem_to_hbm [thread:$0]  %s227, 128, %s229, [#allocation3]
    $region33: #{tpu_custom_call.1} parent=1 // pred_fallthru
      _
    // Predicated region
    $region34: #{tpu_custom_call.1} parent=1 // pred_check
      _
    $region35: #{tpu_custom_call.1} parent=1 // pred_check_branch
      %233 = sbr.rel (0) target = $region37
    $region36: #{tpu_custom_call.1} parent=1 // pred_region
      %235 = dma.done [#allocation3], 128
    $region37: #{tpu_custom_call.1} parent=1 // pred_fallthru
      _
    %236 = vsyncpa [#allocation3], 1

</llo_original>
